<compile_context>
chip_gen: v5e
topology: v5e:2x2
jax: 0.10.0
libtpu: 0.0.40
codegen_flags: <defaults>
</compile_context>

<pallas_src>
import jax
import jax.numpy as jnp
from jax import lax
from jax.experimental import pallas as pl
from jax.experimental.pallas import tpu as pltpu


def _nconv_kernel(x_ref, adjt_ref, o_ref):
    # x_ref: (TB, V, L), adjt_ref: (W, V), o_ref: (TB, W, L)
    # Per batch item: out_b = adj^T @ x_b  -> (W, V) @ (V, L) = (W, L).
    tb = x_ref.shape[0]

    def body(b, carry):
        o_ref[b] = jnp.dot(
            adjt_ref[...], x_ref[b], preferred_element_type=jnp.float32
        ).astype(o_ref.dtype)
        return carry

    lax.fori_loop(0, tb, body, 0, unroll=(tb <= 8))


def _choose_tb(B, tb_max):
    """Batch-tile size: keep >= 2 grid steps when possible (v7x megacore) and
    prefer an exact divisor of B so no remainder block / pad copy is needed."""
    if B <= 1:
        return 1
    cap = max(1, min(tb_max, pl.cdiv(B, 2)))
    best_div = 1
    for tb in range(cap, 0, -1):
        if B % tb == 0:
            best_div = tb
            break
    if best_div >= min(cap, 8) or B <= 64:
        return best_div          # exact tiling, no remainder block
    return cap                   # remainder block handled by Pallas OOB masking


def nconv(x, adj, *, tb_max=32):
    """GWNET NConv: einsum('ncvl,vw->ncwl', x, adj). x:(N,C,V,L), adj:(V,W)."""
    N, C, V, L = x.shape
    Va, W = adj.shape
    assert Va == V, "adj first dim must match x node dim"

    B = N * C
    xb = x.reshape(B, V, L)      # merge leading dims: layout-preserving, no copy
    adjt = adj.T                 # (W, V); tiny one-time transpose outside kernel

    # NOTE: if bf16 inputs are numerically acceptable upstream, cast x/adj to
    # bf16 at the producer — halves HBM reads for this mem-bound op; the kernel
    # already accumulates in f32 via preferred_element_type.

    TB = _choose_tb(B, tb_max)
    grid = (pl.cdiv(B, TB),)

    cost = pl.CostEstimate(
        flops=2 * B * V * W * L,
        transcendentals=0,
        bytes_accessed=(B * V * L + V * W + B * W * L) * x.dtype.itemsize,
    )

    out3 = pl.pallas_call(
        _nconv_kernel,
        out_shape=jax.ShapeDtypeStruct((B, W, L), x.dtype),
        grid_spec=pltpu.PrefetchScalarGridSpec(
            num_scalar_prefetch=0,
            grid=grid,
            in_specs=[
                # Native-layout x tile: fully contiguous (TB, V, L) HBM slab.
                pl.BlockSpec((TB, V, L), lambda i: (i, 0, 0)),
                # adj^T: constant index map -> fetched once, resident in VMEM.
                pl.BlockSpec((W, V), lambda i: (0, 0)),
            ],
            # Native-layout output tile, written once (no padding, no epilogue).
            out_specs=pl.BlockSpec((TB, W, L), lambda i: (i, 0, 0)),
        ),
        compiler_params=pltpu.CompilerParams(
            dimension_semantics=("parallel",),
        ),
        cost_estimate=cost,
    )(xb, adjt)

    return out3.reshape(N, C, W, L)   # split leading dim: no copy


if __name__ == "__main__":
    key = jax.random.PRNGKey(0)
    k_x, k_adj = jax.random.split(key)

    # Small GWNET-like shapes: batch=2, channels=4, nodes=16, seq_len=8
    N, C, V, L = 2, 4, 16, 8
    W = V  # square adjacency, as in GWNET

    x = jax.random.normal(k_x, (N, C, V, L), dtype=jnp.float32)
    adj = jax.random.normal(k_adj, (V, W), dtype=jnp.float32)

    out = jax.block_until_ready(nconv(x, adj))

    ref = jnp.einsum('ncvl,vw->ncwl', x, adj)
    assert out.shape == (N, C, W, L)
    assert jnp.allclose(out, ref, atol=1e-4, rtol=1e-4), "mismatch vs einsum ref"

    print("KERNEL_OK")
</pallas_src>

<mosaic_0001>
module attributes {stable_mosaic.version = 11 : i64} {
  func.func @_nconv_kernel(%arg0: i32, %arg1: memref<4x16x8xf32, #tpu.memory_space<vmem>>, %arg2: memref<16x16xf32, #tpu.memory_space<vmem>>, %arg3: memref<4x16x8xf32, #tpu.memory_space<vmem>>) attributes {dimension_semantics = [#tpu.dimension_semantics<parallel>], iteration_bounds = array<i64: 2>, scalar_prefetch = 0 : i64, scratch_operands = 0 : i64, tpu.core_type = #tpu.core_type<tc>, window_params = [{transform_indices = @transform_0, window_bounds = array<i64: 4, 16, 8>}, {pipeline_mode = #tpu.pipeline_mode<synchronous>, transform_indices = @transform_1, window_bounds = array<i64: 16, 16>}, {transform_indices = @transform_2, window_bounds = array<i64: 4, 16, 8>}]} {
    %c0_i32 = arith.constant 0 : i32
    %c0 = arith.constant 0 : index
    %c0_0 = arith.constant 0 : index
    %0 = vector.load %arg2[%c0, %c0_0] : memref<16x16xf32, #tpu.memory_space<vmem>>, vector<16x16xf32>
    %1 = arith.index_cast %c0_i32 : i32 to index
    %c0_1 = arith.constant 0 : index
    %c0_2 = arith.constant 0 : index
    %2 = vector.load %arg1[%1, %c0_1, %c0_2] : memref<4x16x8xf32, #tpu.memory_space<vmem>>, vector<1x16x8xf32>
    %3 = vector.shape_cast %2 : vector<1x16x8xf32> to vector<16x8xf32>
    %cst = arith.constant dense<0.000000e+00> : vector<16x8xf32>
    %4 = tpu.matmul %0, %3, %cst {dimension_numbers = #tpu.dot_dimension_numbers<[1], [0], [0], [1], [0, 0, 1, 1], [], []>} : vector<16x16xf32>, vector<16x8xf32>, vector<16x8xf32> -> vector<16x8xf32>
    %5 = arith.index_cast %c0_i32 : i32 to index
    %c0_3 = arith.constant 0 : index
    %c0_4 = arith.constant 0 : index
    %6 = vector.load %arg3[%5, %c0_3, %c0_4] : memref<4x16x8xf32, #tpu.memory_space<vmem>>, vector<1x16x8xf32>
    %7 = vector.shape_cast %6 : vector<1x16x8xf32> to vector<16x8xf32>
    %8 = vector.shape_cast %4 : vector<16x8xf32> to vector<1x16x8xf32>
    tpu.vector_store %arg3[%5, %c0_3, %c0_4], %8 {strides = array<i32>} : memref<4x16x8xf32, #tpu.memory_space<vmem>>, vector<1x16x8xf32>,
    %c1_i32 = arith.constant 1 : i32
    %c0_5 = arith.constant 0 : index
    %c0_6 = arith.constant 0 : index
    %9 = vector.load %arg2[%c0_5, %c0_6] : memref<16x16xf32, #tpu.memory_space<vmem>>, vector<16x16xf32>
    %10 = arith.index_cast %c1_i32 : i32 to index
    %c0_7 = arith.constant 0 : index
    %c0_8 = arith.constant 0 : index
    %11 = vector.load %arg1[%10, %c0_7, %c0_8] : memref<4x16x8xf32, #tpu.memory_space<vmem>>, vector<1x16x8xf32>
    %12 = vector.shape_cast %11 : vector<1x16x8xf32> to vector<16x8xf32>
    %cst_9 = arith.constant dense<0.000000e+00> : vector<16x8xf32>
    %13 = tpu.matmul %9, %12, %cst_9 {dimension_numbers = #tpu.dot_dimension_numbers<[1], [0], [0], [1], [0, 0, 1, 1], [], []>} : vector<16x16xf32>, vector<16x8xf32>, vector<16x8xf32> -> vector<16x8xf32>
    %14 = arith.index_cast %c1_i32 : i32 to index
    %c0_10 = arith.constant 0 : index
    %c0_11 = arith.constant 0 : index
    %15 = vector.load %arg3[%14, %c0_10, %c0_11] : memref<4x16x8xf32, #tpu.memory_space<vmem>>, vector<1x16x8xf32>
    %16 = vector.shape_cast %15 : vector<1x16x8xf32> to vector<16x8xf32>
    %17 = vector.shape_cast %13 : vector<16x8xf32> to vector<1x16x8xf32>
    tpu.vector_store %arg3[%14, %c0_10, %c0_11], %17 {strides = array<i32>} : memref<4x16x8xf32, #tpu.memory_space<vmem>>, vector<1x16x8xf32>,
    %c2_i32 = arith.constant 2 : i32
    %c0_12 = arith.constant 0 : index
    %c0_13 = arith.constant 0 : index
    %18 = vector.load %arg2[%c0_12, %c0_13] : memref<16x16xf32, #tpu.memory_space<vmem>>, vector<16x16xf32>
    %19 = arith.index_cast %c2_i32 : i32 to index
    %c0_14 = arith.constant 0 : index
    %c0_15 = arith.constant 0 : index
    %20 = vector.load %arg1[%19, %c0_14, %c0_15] : memref<4x16x8xf32, #tpu.memory_space<vmem>>, vector<1x16x8xf32>
    %21 = vector.shape_cast %20 : vector<1x16x8xf32> to vector<16x8xf32>
    %cst_16 = arith.constant dense<0.000000e+00> : vector<16x8xf32>
    %22 = tpu.matmul %18, %21, %cst_16 {dimension_numbers = #tpu.dot_dimension_numbers<[1], [0], [0], [1], [0, 0, 1, 1], [], []>} : vector<16x16xf32>, vector<16x8xf32>, vector<16x8xf32> -> vector<16x8xf32>
    %23 = arith.index_cast %c2_i32 : i32 to index
    %c0_17 = arith.constant 0 : index
    %c0_18 = arith.constant 0 : index
    %24 = vector.load %arg3[%23, %c0_17, %c0_18] : memref<4x16x8xf32, #tpu.memory_space<vmem>>, vector<1x16x8xf32>
    %25 = vector.shape_cast %24 : vector<1x16x8xf32> to vector<16x8xf32>
    %26 = vector.shape_cast %22 : vector<16x8xf32> to vector<1x16x8xf32>
    tpu.vector_store %arg3[%23, %c0_17, %c0_18], %26 {strides = array<i32>} : memref<4x16x8xf32, #tpu.memory_space<vmem>>, vector<1x16x8xf32>,
    %c3_i32 = arith.constant 3 : i32
    %c0_19 = arith.constant 0 : index
    %c0_20 = arith.constant 0 : index
    %27 = vector.load %arg2[%c0_19, %c0_20] : memref<16x16xf32, #tpu.memory_space<vmem>>, vector<16x16xf32>
    %28 = arith.index_cast %c3_i32 : i32 to index
    %c0_21 = arith.constant 0 : index
    %c0_22 = arith.constant 0 : index
    %29 = vector.load %arg1[%28, %c0_21, %c0_22] : memref<4x16x8xf32, #tpu.memory_space<vmem>>, vector<1x16x8xf32>
    %30 = vector.shape_cast %29 : vector<1x16x8xf32> to vector<16x8xf32>
    %cst_23 = arith.constant dense<0.000000e+00> : vector<16x8xf32>
    %31 = tpu.matmul %27, %30, %cst_23 {dimension_numbers = #tpu.dot_dimension_numbers<[1], [0], [0], [1], [0, 0, 1, 1], [], []>} : vector<16x16xf32>, vector<16x8xf32>, vector<16x8xf32> -> vector<16x8xf32>
    %32 = arith.index_cast %c3_i32 : i32 to index
    %c0_24 = arith.constant 0 : index
    %c0_25 = arith.constant 0 : index
    %33 = vector.load %arg3[%32, %c0_24, %c0_25] : memref<4x16x8xf32, #tpu.memory_space<vmem>>, vector<1x16x8xf32>
    %34 = vector.shape_cast %33 : vector<1x16x8xf32> to vector<16x8xf32>
    %35 = vector.shape_cast %31 : vector<16x8xf32> to vector<1x16x8xf32>
    tpu.vector_store %arg3[%32, %c0_24, %c0_25], %35 {strides = array<i32>} : memref<4x16x8xf32, #tpu.memory_space<vmem>>, vector<1x16x8xf32>,
    %c4_i32 = arith.constant 4 : i32
    return
  }
  func.func @transform_0(%arg0: i32) -> (i32, i32, i32) {
    %c0_i32 = arith.constant 0 : i32
    %c0_i32_0 = arith.constant 0 : i32
    %c0_i32_1 = arith.constant 0 : i32
    return %arg0, %c0_i32, %c0_i32_0 : i32, i32, i32
  }
  func.func @transform_1(%arg0: i32) -> (i32, i32) {
    %c0_i32 = arith.constant 0 : i32
    %c0_i32_0 = arith.constant 0 : i32
    %c0_i32_1 = arith.constant 0 : i32
    return %c0_i32, %c0_i32_0 : i32, i32
  }
  func.func @transform_2(%arg0: i32) -> (i32, i32, i32) {
    %c0_i32 = arith.constant 0 : i32
    %c0_i32_0 = arith.constant 0 : i32
    %c0_i32_1 = arith.constant 0 : i32
    return %arg0, %c0_i32, %c0_i32_0 : i32, i32, i32
  }
}

</mosaic_0001>

<llo_original>
// kernel: tpu_custom_call.1
$region0: #{tpu_custom_call.1}
  #allocation0 [shape = 'u32[]', space=smem, size = 0x4, offset = 0x4, fixed_abs, tag = 'smem constant byte address 0x4 - core index']
  #allocation1 [shape = 'u32[72,128]{1,0:T(1,128)}', space=vmem, size = 0x9000, scoped, tag = 'internal scratch']
  %s0 = inlined_call_operand.vmem [shape: f32[8,16,8], index: 0, kind: input, shape index: {}]
  %s1 = inlined_call_operand.vmem [shape: f32[16,16], index: 1, kind: input, shape index: {}]
  %s2 = inlined_call_operand.vmem [shape: f32[8,16,8], index: 2, kind: output, shape index: {}]
  %s3 = sld [smem:[#allocation0]]
  $region41: #{tpu_custom_call.1} parent=0
    _
  %s5 = ssub.s32 1, %s3
  %s6 = scalar_select 0, %s5, %s3
  loop: start=0, step=1, limit=4
  $region2: #{tpu_custom_call.1} parent=0 // loop_pre_header
    _
  $region3: #{tpu_custom_call.1} parent=0 // loop_header
    %s8 = sphi 0, %s12
    %p9 = scmp.ge.s32.totalorder %s8, 4
    %s18 = sphi 0, %s20
    %s21 = sphi 0, %s18
    %s22 = sphi 0, %s21
    %s38 = sphi 0, %s22
    %s42 = sphi 0, %s42
    %s44 = sphi 0, %s42
    %s45 = sphi 0, %s44
    %s59 = sphi 0, %s45
    %s65 = sphi 0, %s67
    %s68 = sphi 0, %s65
    %s69 = sphi 0, %s68
    %s85 = sphi 0, %s69
  $region4: #{tpu_custom_call.1} parent=0 // loop_header_branch
    %11 = sbr.rel (%p9) target = $region8
  $region5: #{tpu_custom_call.1} parent=0 // loop_body
    %s13 = ssub.s32 %s8, 1
    %s14 = ssub.s32 %s8, 2
    %s15 = sadd.s32 %s8, 1
    %s16 = ssub.s32 %s8, %s15
    %p17 = scmp.eq.s32.totalorder %s16, 0
    %s19 = sadd.s32 %s18, 1
    %s20 = scalar_select %p17, %s18, %s19
    %p23 = pneg %p17
    %p24 = scmp.eq.s32.totalorder %s8, 1
    %p25 = por %p23, %p24
    %p26 = scmp.ne.s32.totalorder %s18, %s21
    %p27 = scmp.eq.s32.totalorder %s8, 0
    %p28 = por %p26, %p27
    %p29 = scmp.ne.s32.totalorder %s18, %s21
    %p30 = scmp.eq.s32.totalorder %s13, 1
    %p31 = por %p29, %p30
    %p32 = scmp.ne.s32.totalorder %s21, %s22
    %p33 = scmp.eq.s32.totalorder %s13, 0
    %p34 = por %p32, %p33
    %p35 = scmp.ne.s32.totalorder %s21, %s22
    %p36 = scmp.eq.s32.totalorder %s14, 1
    %p37 = por %p35, %p36
    %p39 = scmp.ne.s32.totalorder %s22, %s38
    %p40 = scmp.eq.s32.totalorder %s14, 0
    %p41 = por %p39, %p40
    %s43 = sadd.s32 %s42, 1
    %p46 = scmp.eq.s32.totalorder %s8, 1
    %p47 = scmp.ne.s32.totalorder %s42, %s44
    %p48 = scmp.eq.s32.totalorder %s8, 0
    %p49 = por %p47, %p48
    %p50 = scmp.ne.s32.totalorder %s42, %s44
    %p51 = scmp.eq.s32.totalorder %s13, 1
    %p52 = por %p50, %p51
    %p53 = scmp.ne.s32.totalorder %s44, %s45
    %p54 = scmp.eq.s32.totalorder %s13, 0
    %p55 = por %p53, %p54
    %p56 = scmp.ne.s32.totalorder %s44, %s45
    %p57 = scmp.eq.s32.totalorder %s14, 1
    %p58 = por %p56, %p57
    %p60 = scmp.ne.s32.totalorder %s45, %s59
    %p61 = scmp.eq.s32.totalorder %s14, 0
    %p62 = por %p60, %p61
    %s63 = ssub.s32 %s8, %s15
    %p64 = scmp.eq.s32.totalorder %s63, 0
    %s66 = sadd.s32 %s65, 1
    %s67 = scalar_select %p64, %s65, %s66
    %p70 = pneg %p64
    %p71 = scmp.eq.s32.totalorder %s8, 1
    %p72 = por %p70, %p71
    %p73 = scmp.ne.s32.totalorder %s65, %s68
    %p74 = scmp.eq.s32.totalorder %s8, 0
    %p75 = por %p73, %p74
    %p76 = scmp.ne.s32.totalorder %s65, %s68
    %p77 = scmp.eq.s32.totalorder %s13, 1
    %p78 = por %p76, %p77
    %p79 = scmp.ne.s32.totalorder %s68, %s69
    %p80 = scmp.eq.s32.totalorder %s13, 0
    %p81 = por %p79, %p80
    %p82 = scmp.ne.s32.totalorder %s68, %s69
    %p83 = scmp.eq.s32.totalorder %s14, 1
    %p84 = por %p82, %p83
    %p86 = scmp.ne.s32.totalorder %s69, %s85
    %p87 = scmp.eq.s32.totalorder %s14, 0
    %p88 = por %p86, %p87
    %p89 = scmp.le.s32.totalorder 1, %s8
    %p90 = scmp.lt.s32.totalorder %s8, 3
    %p91 = pnand %p89, %p90
    %p92 = pneg %p91
    // Predicated region
    $region9: #{tpu_custom_call.1} parent=5 // pred_check
      _
    $region10: #{tpu_custom_call.1} parent=5 // pred_check_branch
      %94 = sbr.rel (%p91) target = $region12
    $region11: #{tpu_custom_call.1} parent=5 // pred_region
      %s95 = ssub.s32 %s8, 1
      // Predicated region
      $region13: #{tpu_custom_call.1} parent=11 // pred_check
        %p96 = pneg %p55
      $region14: #{tpu_custom_call.1} parent=11 // pred_check_branch
        %98 = sbr.rel (%p96) target = $region16
      $region15: #{tpu_custom_call.1} parent=11 // pred_region
        _
      $region16: #{tpu_custom_call.1} parent=11 // pred_fallthru
        _
    $region12: #{tpu_custom_call.1} parent=5 // pred_fallthru
      _
    %p99 = scmp.lt.s32.totalorder %s8, 2
    // Predicated region
    $region17: #{tpu_custom_call.1} parent=5 // pred_check
      %p100 = pneg %p99
    $region18: #{tpu_custom_call.1} parent=5 // pred_check_branch
      %102 = sbr.rel (%p100) target = $region20
    $region19: #{tpu_custom_call.1} parent=5 // pred_region
      // Predicated region
      $region21: #{tpu_custom_call.1} parent=19 // pred_check
        %p103 = pneg %p28
      $region22: #{tpu_custom_call.1} parent=19 // pred_check_branch
        %105 = sbr.rel (%p103) target = $region24
      $region23: #{tpu_custom_call.1} parent=19 // pred_region
        %s106 = smul.u32 4, %s8
        %p107 = scmp.lt.s32.totalorder %s106, 7
        %s108 = scalar_select %p107, %s106, 7
        %s109 = smul.addr %s108, 2
        %s110 = smul.addr %s109, 8
        %s111 = scalar_lea.vmem %s0, %s110
        %s112 = smul.u32 4, %s8
      $region24: #{tpu_custom_call.1} parent=19 // pred_fallthru
        _
    $region20: #{tpu_custom_call.1} parent=5 // pred_fallthru
      _
    %p113 = scmp.le.s32.totalorder 1, %s8
    %p114 = scmp.lt.s32.totalorder %s8, 3
    %p115 = pnand %p113, %p114
    %p116 = pneg %p115
    // Predicated region
    $region25: #{tpu_custom_call.1} parent=5 // pred_check
      _
    $region26: #{tpu_custom_call.1} parent=5 // pred_check_branch
      %118 = sbr.rel (%p115) target = $region28
    $region27: #{tpu_custom_call.1} parent=5 // pred_region
      %s119 = ssub.s32 %s8, 1
      %s120 = smul.u32 4, %s13
      %p121 = scmp.lt.s32.totalorder %s120, 7
      %s122 = scalar_select %p121, %s120, 7
      %s123 = smul.addr %s122, 2
      %s124 = smul.addr %s123, 8
      %s125 = scalar_lea.vmem %s0, %s124
      %p126 = pneg %p34
      %p127 = pneg %p31
      %p128 = pneg %p55
      %p129 = pneg %p52
      %p130 = pneg %p81
      %p131 = pneg %p78
      %s132 = smul.u32 4, %s13
      %p133 = scmp.lt.s32.totalorder %s132, 7
      %s134 = scalar_select %p133, %s132, 7
      %s135 = smul.addr %s134, 2
      %s136 = smul.addr %s135, 8
      %s137 = scalar_lea.vmem %s2, %s136
      %s138 = smul.u32 4, %s13
      %p139 = scmp.lt.s32.totalorder %s138, 7
      %s140 = scalar_select %p139, %s138, 7
      %s141 = smul.addr %s140, 2
      %s142 = smul.addr %s141, 8
      %s143 = scalar_lea.vmem %s0, %s142
      %s144 = smul.u32 4, %s13
      %s145 = smul.u32 4, %s13
      %p146 = scmp.lt.s32.totalorder %s145, 7
      %s147 = scalar_select %p146, %s145, 7
      %s148 = smul.addr %s147, 2
      %s149 = smul.addr %s148, 8
      %s150 = scalar_lea.vmem %s2, %s149
      %s151 = smul.u32 4, %s13
      %v152 = vld [vmem:[%s1] sm:$0xff]
      %v153 = vld [vmem:[%s1 + $0x8] sm:$0xff]
      %v154 = vld [vmem:[%s143] sm:$0xff]
      %v155 = vld [vmem:[%s143 + $0x8] sm:$0xff]
      %vm156 = vcmask 130048
      %v158 = vsel %vm156, %v152, 0
      %v161 = vsel %vm156, %v153, 0
      %163 = vmatpush.msra.mxu0 0.0
      %164 = vmatpush.msra.mxu0 0.0
      %165 = vmatpush.msra.mxu0 0.0
      %166 = vmatpush.msra.mxu0 0.0
      %167 = vmatpush.msra.mxu0 0.0
      %168 = vmatpush.msra.mxu0 0.0
      %169 = vmatpush.msra.mxu0 0.0
      %170 = vmatpush.msra.mxu0 0.0
      %171 = vmatpush.msra.mxu0 0.0
      %172 = vmatpush.msra.mxu0 0.0
      %173 = vmatpush.msra.mxu0 0.0
      %174 = vmatpush.msra.mxu0 0.0
      %175 = vmatpush.msra.mxu0 0.0
      %176 = vmatpush.msra.mxu0 0.0
      %177 = vmatpush.msra.mxu0 %v155
      %178 = vmatpush.msra.mxu0 %v154
      %179 = vmatmul.f32.gmra.mxu0 %v158
      %v180 = vpop.f32.mrf.mxu0
      %v181 = vadd.f32 0.0, %v180
      %182 = vmatmul.f32.gmra.mxu0 %v161
      %v183 = vpop.f32.mrf.mxu0
      %v184 = vadd.f32 0.0, %v183
      %185 = vdwg.mxu0
      %vm186 = vcmask 64512
      %187 = vst.msk [vmem:[%s150] sm:$0xff] %vm186, %v181
      %188 = vst.msk [vmem:[%s150 + $0x8] sm:$0xff] %vm186, %v184
      %v189 = vld [vmem:[%s1] sm:$0xff]
      %v190 = vld [vmem:[%s1 + $0x8] sm:$0xff]
      %s191 = scalar_lea.vmem %s143, 16
      %v192 = vld [vmem:[%s191] sm:$0xff]
      %v193 = vld [vmem:[%s191 + $0x8] sm:$0xff]
      %v195 = vsel %vm156, %v189, 0
      %v198 = vsel %vm156, %v190, 0
      %200 = vmatpush.msra.mxu0 0.0
      %201 = vmatpush.msra.mxu0 0.0
      %202 = vmatpush.msra.mxu0 0.0
      %203 = vmatpush.msra.mxu0 0.0
      %204 = vmatpush.msra.mxu0 0.0
      %205 = vmatpush.msra.mxu0 0.0
      %206 = vmatpush.msra.mxu0 0.0
      %207 = vmatpush.msra.mxu0 0.0
      %208 = vmatpush.msra.mxu0 0.0
      %209 = vmatpush.msra.mxu0 0.0
      %210 = vmatpush.msra.mxu0 0.0
      %211 = vmatpush.msra.mxu0 0.0
      %212 = vmatpush.msra.mxu0 0.0
      %213 = vmatpush.msra.mxu0 0.0
      %214 = vmatpush.msra.mxu0 %v193
      %215 = vmatpush.msra.mxu0 %v192
      %216 = vmatmul.f32.gmra.mxu0 %v195
      %v217 = vpop.f32.mrf.mxu0
      %v218 = vadd.f32 0.0, %v217
      %219 = vmatmul.f32.gmra.mxu0 %v198
      %v220 = vpop.f32.mrf.mxu0
      %v221 = vadd.f32 0.0, %v220
      %222 = vdwg.mxu0
      %s223 = scalar_lea.vmem %s150, 16
      %224 = vst.msk [vmem:[%s223] sm:$0xff] %vm186, %v218
      %225 = vst.msk [vmem:[%s223 + $0x8] sm:$0xff] %vm186, %v221
      %v226 = vld [vmem:[%s1] sm:$0xff]
      %v227 = vld [vmem:[%s1 + $0x8] sm:$0xff]
      %s228 = scalar_lea.vmem %s143, 32
      %v229 = vld [vmem:[%s228] sm:$0xff]
      %v230 = vld [vmem:[%s228 + $0x8] sm:$0xff]
      %v232 = vsel %vm156, %v226, 0
      %v235 = vsel %vm156, %v227, 0
      %237 = vmatpush.msra.mxu0 0.0
      %238 = vmatpush.msra.mxu0 0.0
      %239 = vmatpush.msra.mxu0 0.0
      %240 = vmatpush.msra.mxu0 0.0
      %241 = vmatpush.msra.mxu0 0.0
      %242 = vmatpush.msra.mxu0 0.0
      %243 = vmatpush.msra.mxu0 0.0
      %244 = vmatpush.msra.mxu0 0.0
      %245 = vmatpush.msra.mxu0 0.0
      %246 = vmatpush.msra.mxu0 0.0
      %247 = vmatpush.msra.mxu0 0.0
      %248 = vmatpush.msra.mxu0 0.0
      %249 = vmatpush.msra.mxu0 0.0
      %250 = vmatpush.msra.mxu0 0.0
      %251 = vmatpush.msra.mxu0 %v230
      %252 = vmatpush.msra.mxu0 %v229
      %253 = vmatmul.f32.gmra.mxu0 %v232
      %v254 = vpop.f32.mrf.mxu0
      %v255 = vadd.f32 0.0, %v254
      %256 = vmatmul.f32.gmra.mxu0 %v235
      %v257 = vpop.f32.mrf.mxu0
      %v258 = vadd.f32 0.0, %v257
      %259 = vdwg.mxu0
      %s260 = scalar_lea.vmem %s150, 32
      %261 = vst.msk [vmem:[%s260] sm:$0xff] %vm186, %v255
      %262 = vst.msk [vmem:[%s260 + $0x8] sm:$0xff] %vm186, %v258
      %v263 = vld [vmem:[%s1] sm:$0xff]
      %v264 = vld [vmem:[%s1 + $0x8] sm:$0xff]
      %s265 = scalar_lea.vmem %s143, 48
      %v266 = vld [vmem:[%s265] sm:$0xff]
      %v267 = vld [vmem:[%s265 + $0x8] sm:$0xff]
      %v269 = vsel %vm156, %v263, 0
      %v272 = vsel %vm156, %v264, 0
      %274 = vmatpush.msra.mxu0 0.0
      %275 = vmatpush.msra.mxu0 0.0
      %276 = vmatpush.msra.mxu0 0.0
      %277 = vmatpush.msra.mxu0 0.0
      %278 = vmatpush.msra.mxu0 0.0
      %279 = vmatpush.msra.mxu0 0.0
      %280 = vmatpush.msra.mxu0 0.0
      %281 = vmatpush.msra.mxu0 0.0
      %282 = vmatpush.msra.mxu0 0.0
      %283 = vmatpush.msra.mxu0 0.0
      %284 = vmatpush.msra.mxu0 0.0
      %285 = vmatpush.msra.mxu0 0.0
      %286 = vmatpush.msra.mxu0 0.0
      %287 = vmatpush.msra.mxu0 0.0
      %288 = vmatpush.msra.mxu0 %v267
      %289 = vmatpush.msra.mxu0 %v266
      %290 = vmatmul.f32.gmra.mxu0 %v269
      %v291 = vpop.f32.mrf.mxu0
      %v292 = vadd.f32 0.0, %v291
      %293 = vmatmul.f32.gmra.mxu0 %v272
      %v294 = vpop.f32.mrf.mxu0
      %v295 = vadd.f32 0.0, %v294
      %296 = vdwg.mxu0
      %s297 = scalar_lea.vmem %s150, 48
      %298 = vst.msk [vmem:[%s297] sm:$0xff] %vm186, %v292
      %299 = vst.msk [vmem:[%s297 + $0x8] sm:$0xff] %vm186, %v295
      %s300 = smul.u32 4, %s13
      %p301 = scmp.lt.s32.totalorder %s300, 7
      %s302 = scalar_select %p301, %s300, 7
      %s303 = smul.addr %s302, 2
      %s304 = smul.addr %s303, 8
      %s305 = scalar_lea.vmem %s2, %s304
      // Predicated region
      $region29: #{tpu_custom_call.1} parent=27 // pred_check
        %p306 = pneg %p78
      $region30: #{tpu_custom_call.1} parent=27 // pred_check_branch
        %308 = sbr.rel (%p306) target = $region32
      $region31: #{tpu_custom_call.1} parent=27 // pred_region
        %s309 = smul.u32 4, %s13
      $region32: #{tpu_custom_call.1} parent=27 // pred_fallthru
        _
    $region28: #{tpu_custom_call.1} parent=5 // pred_fallthru
      _
    %p310 = scmp.le.s32.totalorder 2, %s8
    // Predicated region
    $region33: #{tpu_custom_call.1} parent=5 // pred_check
      %p311 = pneg %p310
    $region34: #{tpu_custom_call.1} parent=5 // pred_check_branch
      %313 = sbr.rel (%p311) target = $region36
    $region35: #{tpu_custom_call.1} parent=5 // pred_region
      %s314 = ssub.s32 %s8, 2
      // Predicated region
      $region37: #{tpu_custom_call.1} parent=35 // pred_check
        %p315 = pneg %p84
      $region38: #{tpu_custom_call.1} parent=35 // pred_check_branch
        %317 = sbr.rel (%p315) target = $region40
      $region39: #{tpu_custom_call.1} parent=35 // pred_region
        %s318 = smul.u32 4, %s14
        %p319 = scmp.lt.s32.totalorder %s318, 7
        %s320 = scalar_select %p319, %s318, 7
        %s321 = smul.addr %s320, 2
        %s322 = smul.addr %s321, 8
        %s323 = scalar_lea.vmem %s2, %s322
      $region40: #{tpu_custom_call.1} parent=35 // pred_fallthru
        _
    $region36: #{tpu_custom_call.1} parent=5 // pred_fallthru
      _
  $region6: #{tpu_custom_call.1} parent=0 // loop_footer
    %s12 = sadd.s32 1, %s8
  $region7: #{tpu_custom_call.1} parent=0 // loop_footer_branch
    %7 = sbr.rel target = $region3
  $region8: #{tpu_custom_call.1} parent=0 // loop_exit
    _

</llo_original>
